<compile_context>
chip_gen: v6e
topology: v6e:2x2x1
jax: 0.10.0
libtpu: 0.0.40
codegen_flags: <defaults>
</compile_context>

<pallas_src>
import math

import jax
import jax.numpy as jnp
import numpy as np
from jax.experimental import pallas as pl
from jax.experimental.pallas import tpu as pltpu

LOG2PI = math.log(2.0 * math.pi)
LOGSCALE_FACTOR = 3.0  # Conv2dZeros logscale_factor

# 3x3 tap offsets, k = (dy+1)*3 + (dx+1) matches OIHW weight flattening.
_OFFSETS = [(dy, dx) for dy in (-1, 0, 1) for dx in (-1, 0, 1)]


def _make_split2d_kernel(NB, C, H, W):
    """Builds the kernel for one batch block of NB elements."""
    C2 = C // 2          # conv in-channels; conv out-channels = C
    HW = H * W

    def kernel(x_ref, mask_ref, w_ref, b_ref, out_ref):
        # x_ref   : (NB, C*HW) VMEM - all channels, spatial flattened (lane-dense)
        # mask_ref: (9, HW)    VMEM - {0,1} validity mask per 3x3 tap ("same" zero pad)
        # w_ref   : (C*C2*9,)  SMEM - conv weights pre-scaled by exp(logs*3), OIHW flattened
        # b_ref   : (C,)       SMEM - conv bias pre-scaled by exp(logs*3)
        # out_ref : (NB, 128)  VMEM - per-batch logdet contribution (lane-broadcast)
        masks = mask_ref[...]                                   # (9, HW)

        # Accumulate all C conv output maps, touching each shifted/masked tap
        # exactly once (low register pressure: C accumulators + current tap).
        h = [jnp.zeros((NB, HW), jnp.float32) for _ in range(C)]
        for ci in range(C2):
            z = x_ref[:, ci * HW:(ci + 1) * HW].astype(jnp.float32)   # (NB, HW)
            for k, (dy, dx) in enumerate(_OFFSETS):
                off = dy * W + dx
                if off == 0:
                    t = z                                       # center tap: no shift, full mask
                else:
                    # r[f] = z[f + off] (mod HW); mask zeroes out-of-image taps
                    r = pltpu.roll(z, shift=(-off) % HW, axis=1)
                    t = r * masks[k:k + 1, :]
                for c in range(C):
                    h[c] = h[c] + t * w_ref[(c * C2 + ci) * 9 + k]

        # Accumulate gaussian_p over all mean/logs channel pairs; the constant
        # -0.5*log(2*pi) term is folded in after the final reduction.
        p_acc = jnp.zeros((NB, HW), jnp.float32)
        for j in range(C2):
            cm = 2 * j        # "cross" split: even output channels -> mean
            cl = 2 * j + 1    # odd output channels -> logs
            mean = h[cm] + b_ref[cm]
            logs = h[cl] + b_ref[cl]
            z2 = x_ref[:, (C2 + j) * HW:(C2 + j + 1) * HW].astype(jnp.float32)
            d = z2 - mean
            p_acc = p_acc - logs - 0.5 * (d * d) * jnp.exp(-2.0 * logs)

        # One cross-lane reduction per batch row; lane-dense store.
        row = jnp.sum(p_acc, axis=1, keepdims=True) - 0.5 * LOG2PI * C2 * HW  # (NB, 1)
        out_ref[...] = jnp.broadcast_to(row, (NB, 128))

    return kernel


def _make_tap_masks(H, W):
    """(9, H*W) float32 {0,1} masks: tap (dy,dx) at flat pos f is in-image."""
    yy, xx = np.meshgrid(np.arange(H), np.arange(W), indexing="ij")
    yy = yy.reshape(-1)
    xx = xx.reshape(-1)
    rows = []
    for dy, dx in _OFFSETS:
        valid = (yy + dy >= 0) & (yy + dy < H) & (xx + dx >= 0) & (xx + dx < W)
        rows.append(valid.astype(np.float32))
    return np.stack(rows)                                       # (9, H*W)


def split2d_forward(x, weight, bias, logs, logdet=0.0, *, batch_block=None):
    """Split2d.forward(reverse=False).

    x      : (N, C, H, W) float32  (NCHW, matching the PyTorch module)
    weight : (C, C//2, 3, 3)       conv weight (OIHW)
    bias   : (C,)                  conv bias
    logs   : (C, 1, 1)             Conv2dZeros logs parameter
    Returns (z1, logdet) with z1: (N, C//2, H, W), logdet: (N,)
    """
    N, C, H, W = x.shape
    C2 = C // 2
    HW = H * W

    # Module output z1 = first channel half (plain XLA slice, not a kernel input).
    z1 = x[:, :C2]

    # Lane-dense flat layout; channel halves are selected inside the kernel.
    x2d = x.reshape(N, C * HW)

    masks = jnp.asarray(_make_tap_masks(H, W))                  # (9, HW) f32

    # Fold the Conv2dZeros output scale exp(logs*3) into weights & bias (exact):
    #   (conv_w(z)+b) * s == conv_{w*s}(z) + b*s
    scale = jnp.exp(logs.astype(jnp.float32).reshape(-1) * LOGSCALE_FACTOR)  # (C,)
    w_scaled = (weight.astype(jnp.float32) * scale[:, None, None, None]).reshape(-1)
    b_scaled = bias.astype(jnp.float32).reshape(-1) * scale     # (C,)

    # Whole batch per grid step by default (tiny per-step data at these sizes).
    NB = N if batch_block is None else batch_block
    assert N % NB == 0, "batch_block must divide N"
    assert NB == N or NB % 8 == 0, "partial batch blocks must be a multiple of 8"

    kernel = _make_split2d_kernel(NB, C, H, W)

    out = pl.pallas_call(
        kernel,
        out_shape=jax.ShapeDtypeStruct((N, 128), jnp.float32),
        grid=(N // NB,),
        in_specs=[
            pl.BlockSpec((NB, C * HW), lambda b: (b, 0)),
            pl.BlockSpec((9, HW), lambda b: (0, 0)),
            pl.BlockSpec(memory_space=pltpu.MemorySpace.SMEM),
            pl.BlockSpec(memory_space=pltpu.MemorySpace.SMEM),
        ],
        out_specs=pl.BlockSpec((NB, 128), lambda b: (b, 0)),
        compiler_params=pltpu.CompilerParams(
            dimension_semantics=("parallel",)),
    )(x2d, masks, w_scaled, b_scaled)

    logdet_per_batch = out[:, 0]
    return z1, logdet_per_batch + logdet


def split2d_forward_reference(x, weight, bias, logs, logdet=0.0):
    """Pure-JAX reference of the same forward pass (for validation)."""
    C = x.shape[1]
    C2 = C // 2
    z1, z2 = x[:, :C2], x[:, C2:]
    h = jax.lax.conv_general_dilated(
        z1, weight, window_strides=(1, 1), padding=((1, 1), (1, 1)),
        dimension_numbers=("NCHW", "OIHW", "NCHW"))
    h = h + bias.reshape(1, -1, 1, 1)
    h = h * jnp.exp(logs.reshape(1, -1, 1, 1) * LOGSCALE_FACTOR)
    mean, lg = h[:, 0::2], h[:, 1::2]
    p = -0.5 * (lg * 2.0 + (z2 - mean) ** 2 / jnp.exp(lg * 2.0) + LOG2PI)
    return z1, jnp.sum(p, axis=(1, 2, 3)) + logdet


if __name__ == "__main__":
    # Small shapes consistent with the module: num_channels=4, 16x16 spatial.
    N, C, H, W = 2, 4, 16, 16
    C2 = C // 2

    key = jax.random.PRNGKey(0)
    kx, kw, kb, kl = jax.random.split(key, 4)
    x = jax.random.normal(kx, (N, C, H, W), dtype=jnp.float32)

    # NOTE: the PyTorch __init__ zero-initializes these parameters; here we use
    # small deterministic random values so the conv / reduction path is
    # actually exercised (setting them to zero reproduces the torch init).
    weight = 0.1 * jax.random.normal(kw, (C, C2, 3, 3), dtype=jnp.float32)
    bias = 0.1 * jax.random.normal(kb, (C,), dtype=jnp.float32)
    logs = 0.1 * jax.random.normal(kl, (C, 1, 1), dtype=jnp.float32)

    z1, logdet = split2d_forward(x, weight, bias, logs, logdet=0.0)
    jax.block_until_ready((z1, logdet))

    z1_ref, logdet_ref = split2d_forward_reference(x, weight, bias, logs, logdet=0.0)
    np.testing.assert_allclose(np.asarray(z1), np.asarray(z1_ref), rtol=1e-5, atol=1e-5)
    np.testing.assert_allclose(np.asarray(logdet), np.asarray(logdet_ref),
                               rtol=1e-4, atol=1e-4)

    print("KERNEL_OK")
</pallas_src>

<mosaic_0001>
module attributes {stable_mosaic.version = 11 : i64} {
  func.func @kernel(%arg0: i32, %arg1: memref<2x1024xf32, #tpu.memory_space<vmem>>, %arg2: memref<9x256xf32, #tpu.memory_space<vmem>>, %arg3: memref<72xf32, #tpu.memory_space<smem>>, %arg4: memref<4xf32, #tpu.memory_space<smem>>, %arg5: memref<2x128xf32, #tpu.memory_space<vmem>>) attributes {dimension_semantics = [#tpu.dimension_semantics<parallel>], iteration_bounds = array<i64: 1>, scalar_prefetch = 0 : i64, scratch_operands = 0 : i64, tpu.core_type = #tpu.core_type<tc>, window_params = [{transform_indices = @transform_0, window_bounds = array<i64: 2, 1024>}, {pipeline_mode = #tpu.pipeline_mode<synchronous>, transform_indices = @transform_1, window_bounds = array<i64: 9, 256>}, {transform_indices = @transform_2, window_bounds = array<i64: 72>}, {transform_indices = @transform_3, window_bounds = array<i64: 4>}, {transform_indices = @transform_4, window_bounds = array<i64: 2, 128>}]} {
    %c0 = arith.constant 0 : index
    %c0_0 = arith.constant 0 : index
    %0 = vector.load %arg2[%c0, %c0_0] : memref<9x256xf32, #tpu.memory_space<vmem>>, vector<9x256xf32>
    %cst = arith.constant 0.000000e+00 : f32
    %1 = vector.broadcast %cst : f32 to vector<2x256xf32>
    %cst_1 = arith.constant 0.000000e+00 : f32
    %2 = vector.broadcast %cst_1 : f32 to vector<2x256xf32>
    %cst_2 = arith.constant 0.000000e+00 : f32
    %3 = vector.broadcast %cst_2 : f32 to vector<2x256xf32>
    %cst_3 = arith.constant 0.000000e+00 : f32
    %4 = vector.broadcast %cst_3 : f32 to vector<2x256xf32>
    %c0_4 = arith.constant 0 : index
    %c0_5 = arith.constant 0 : index
    %5 = vector.load %arg1[%c0_4, %c0_5] : memref<2x1024xf32, #tpu.memory_space<vmem>>, vector<2x256xf32>
    %c17_i32 = arith.constant 17 : i32
    %6 = tpu.dynamic_rotate %5 by %c17_i32 dim 1 : vector<2x256xf32>, i32 -> vector<2x256xf32>
    %7 = vector.extract_strided_slice %0 {offsets = [0, 0], sizes = [1, 256], strides = [1, 1]} : vector<9x256xf32> to vector<1x256xf32>
    %8 = vector.broadcast %7 : vector<1x256xf32> to vector<2x256xf32>
    %9 = arith.mulf %6, %8 : vector<2x256xf32>
    %c0_6 = arith.constant 0 : index
    %10 = memref.load %arg3[%c0_6] : memref<72xf32, #tpu.memory_space<smem>>
    %11 = vector.broadcast %10 : f32 to vector<2x256xf32>
    %12 = arith.mulf %9, %11 : vector<2x256xf32>
    %13 = arith.addf %1, %12 : vector<2x256xf32>
    %c18 = arith.constant 18 : index
    %14 = memref.load %arg3[%c18] : memref<72xf32, #tpu.memory_space<smem>>
    %15 = vector.broadcast %14 : f32 to vector<2x256xf32>
    %16 = arith.mulf %9, %15 : vector<2x256xf32>
    %17 = arith.addf %2, %16 : vector<2x256xf32>
    %c36 = arith.constant 36 : index
    %18 = memref.load %arg3[%c36] : memref<72xf32, #tpu.memory_space<smem>>
    %19 = vector.broadcast %18 : f32 to vector<2x256xf32>
    %20 = arith.mulf %9, %19 : vector<2x256xf32>
    %21 = arith.addf %3, %20 : vector<2x256xf32>
    %c54 = arith.constant 54 : index
    %22 = memref.load %arg3[%c54] : memref<72xf32, #tpu.memory_space<smem>>
    %23 = vector.broadcast %22 : f32 to vector<2x256xf32>
    %24 = arith.mulf %9, %23 : vector<2x256xf32>
    %25 = arith.addf %4, %24 : vector<2x256xf32>
    %c16_i32 = arith.constant 16 : i32
    %26 = tpu.dynamic_rotate %5 by %c16_i32 dim 1 : vector<2x256xf32>, i32 -> vector<2x256xf32>
    %27 = vector.extract_strided_slice %0 {offsets = [1, 0], sizes = [1, 256], strides = [1, 1]} : vector<9x256xf32> to vector<1x256xf32>
    %28 = vector.broadcast %27 : vector<1x256xf32> to vector<2x256xf32>
    %29 = arith.mulf %26, %28 : vector<2x256xf32>
    %c1 = arith.constant 1 : index
    %30 = memref.load %arg3[%c1] : memref<72xf32, #tpu.memory_space<smem>>
    %31 = vector.broadcast %30 : f32 to vector<2x256xf32>
    %32 = arith.mulf %29, %31 : vector<2x256xf32>
    %33 = arith.addf %13, %32 : vector<2x256xf32>
    %c19 = arith.constant 19 : index
    %34 = memref.load %arg3[%c19] : memref<72xf32, #tpu.memory_space<smem>>
    %35 = vector.broadcast %34 : f32 to vector<2x256xf32>
    %36 = arith.mulf %29, %35 : vector<2x256xf32>
    %37 = arith.addf %17, %36 : vector<2x256xf32>
    %c37 = arith.constant 37 : index
    %38 = memref.load %arg3[%c37] : memref<72xf32, #tpu.memory_space<smem>>
    %39 = vector.broadcast %38 : f32 to vector<2x256xf32>
    %40 = arith.mulf %29, %39 : vector<2x256xf32>
    %41 = arith.addf %21, %40 : vector<2x256xf32>
    %c55 = arith.constant 55 : index
    %42 = memref.load %arg3[%c55] : memref<72xf32, #tpu.memory_space<smem>>
    %43 = vector.broadcast %42 : f32 to vector<2x256xf32>
    %44 = arith.mulf %29, %43 : vector<2x256xf32>
    %45 = arith.addf %25, %44 : vector<2x256xf32>
    %c15_i32 = arith.constant 15 : i32
    %46 = tpu.dynamic_rotate %5 by %c15_i32 dim 1 : vector<2x256xf32>, i32 -> vector<2x256xf32>
    %47 = vector.extract_strided_slice %0 {offsets = [2, 0], sizes = [1, 256], strides = [1, 1]} : vector<9x256xf32> to vector<1x256xf32>
    %48 = vector.broadcast %47 : vector<1x256xf32> to vector<2x256xf32>
    %49 = arith.mulf %46, %48 : vector<2x256xf32>
    %c2 = arith.constant 2 : index
    %50 = memref.load %arg3[%c2] : memref<72xf32, #tpu.memory_space<smem>>
    %51 = vector.broadcast %50 : f32 to vector<2x256xf32>
    %52 = arith.mulf %49, %51 : vector<2x256xf32>
    %53 = arith.addf %33, %52 : vector<2x256xf32>
    %c20 = arith.constant 20 : index
    %54 = memref.load %arg3[%c20] : memref<72xf32, #tpu.memory_space<smem>>
    %55 = vector.broadcast %54 : f32 to vector<2x256xf32>
    %56 = arith.mulf %49, %55 : vector<2x256xf32>
    %57 = arith.addf %37, %56 : vector<2x256xf32>
    %c38 = arith.constant 38 : index
    %58 = memref.load %arg3[%c38] : memref<72xf32, #tpu.memory_space<smem>>
    %59 = vector.broadcast %58 : f32 to vector<2x256xf32>
    %60 = arith.mulf %49, %59 : vector<2x256xf32>
    %61 = arith.addf %41, %60 : vector<2x256xf32>
    %c56 = arith.constant 56 : index
    %62 = memref.load %arg3[%c56] : memref<72xf32, #tpu.memory_space<smem>>
    %63 = vector.broadcast %62 : f32 to vector<2x256xf32>
    %64 = arith.mulf %49, %63 : vector<2x256xf32>
    %65 = arith.addf %45, %64 : vector<2x256xf32>
    %c1_i32 = arith.constant 1 : i32
    %66 = tpu.dynamic_rotate %5 by %c1_i32 dim 1 : vector<2x256xf32>, i32 -> vector<2x256xf32>
    %67 = vector.extract_strided_slice %0 {offsets = [3, 0], sizes = [1, 256], strides = [1, 1]} : vector<9x256xf32> to vector<1x256xf32>
    %68 = vector.broadcast %67 : vector<1x256xf32> to vector<2x256xf32>
    %69 = arith.mulf %66, %68 : vector<2x256xf32>
    %c3 = arith.constant 3 : index
    %70 = memref.load %arg3[%c3] : memref<72xf32, #tpu.memory_space<smem>>
    %71 = vector.broadcast %70 : f32 to vector<2x256xf32>
    %72 = arith.mulf %69, %71 : vector<2x256xf32>
    %73 = arith.addf %53, %72 : vector<2x256xf32>
    %c21 = arith.constant 21 : index
    %74 = memref.load %arg3[%c21] : memref<72xf32, #tpu.memory_space<smem>>
    %75 = vector.broadcast %74 : f32 to vector<2x256xf32>
    %76 = arith.mulf %69, %75 : vector<2x256xf32>
    %77 = arith.addf %57, %76 : vector<2x256xf32>
    %c39 = arith.constant 39 : index
    %78 = memref.load %arg3[%c39] : memref<72xf32, #tpu.memory_space<smem>>
    %79 = vector.broadcast %78 : f32 to vector<2x256xf32>
    %80 = arith.mulf %69, %79 : vector<2x256xf32>
    %81 = arith.addf %61, %80 : vector<2x256xf32>
    %c57 = arith.constant 57 : index
    %82 = memref.load %arg3[%c57] : memref<72xf32, #tpu.memory_space<smem>>
    %83 = vector.broadcast %82 : f32 to vector<2x256xf32>
    %84 = arith.mulf %69, %83 : vector<2x256xf32>
    %85 = arith.addf %65, %84 : vector<2x256xf32>
    %c4 = arith.constant 4 : index
    %86 = memref.load %arg3[%c4] : memref<72xf32, #tpu.memory_space<smem>>
    %87 = vector.broadcast %86 : f32 to vector<2x256xf32>
    %88 = arith.mulf %5, %87 : vector<2x256xf32>
    %89 = arith.addf %73, %88 : vector<2x256xf32>
    %c22 = arith.constant 22 : index
    %90 = memref.load %arg3[%c22] : memref<72xf32, #tpu.memory_space<smem>>
    %91 = vector.broadcast %90 : f32 to vector<2x256xf32>
    %92 = arith.mulf %5, %91 : vector<2x256xf32>
    %93 = arith.addf %77, %92 : vector<2x256xf32>
    %c40 = arith.constant 40 : index
    %94 = memref.load %arg3[%c40] : memref<72xf32, #tpu.memory_space<smem>>
    %95 = vector.broadcast %94 : f32 to vector<2x256xf32>
    %96 = arith.mulf %5, %95 : vector<2x256xf32>
    %97 = arith.addf %81, %96 : vector<2x256xf32>
    %c58 = arith.constant 58 : index
    %98 = memref.load %arg3[%c58] : memref<72xf32, #tpu.memory_space<smem>>
    %99 = vector.broadcast %98 : f32 to vector<2x256xf32>
    %100 = arith.mulf %5, %99 : vector<2x256xf32>
    %101 = arith.addf %85, %100 : vector<2x256xf32>
    %c255_i32 = arith.constant 255 : i32
    %102 = tpu.dynamic_rotate %5 by %c255_i32 dim 1 : vector<2x256xf32>, i32 -> vector<2x256xf32>
    %103 = vector.extract_strided_slice %0 {offsets = [5, 0], sizes = [1, 256], strides = [1, 1]} : vector<9x256xf32> to vector<1x256xf32>
    %104 = vector.broadcast %103 : vector<1x256xf32> to vector<2x256xf32>
    %105 = arith.mulf %102, %104 : vector<2x256xf32>
    %c5 = arith.constant 5 : index
    %106 = memref.load %arg3[%c5] : memref<72xf32, #tpu.memory_space<smem>>
    %107 = vector.broadcast %106 : f32 to vector<2x256xf32>
    %108 = arith.mulf %105, %107 : vector<2x256xf32>
    %109 = arith.addf %89, %108 : vector<2x256xf32>
    %c23 = arith.constant 23 : index
    %110 = memref.load %arg3[%c23] : memref<72xf32, #tpu.memory_space<smem>>
    %111 = vector.broadcast %110 : f32 to vector<2x256xf32>
    %112 = arith.mulf %105, %111 : vector<2x256xf32>
    %113 = arith.addf %93, %112 : vector<2x256xf32>
    %c41 = arith.constant 41 : index
    %114 = memref.load %arg3[%c41] : memref<72xf32, #tpu.memory_space<smem>>
    %115 = vector.broadcast %114 : f32 to vector<2x256xf32>
    %116 = arith.mulf %105, %115 : vector<2x256xf32>
    %117 = arith.addf %97, %116 : vector<2x256xf32>
    %c59 = arith.constant 59 : index
    %118 = memref.load %arg3[%c59] : memref<72xf32, #tpu.memory_space<smem>>
    %119 = vector.broadcast %118 : f32 to vector<2x256xf32>
    %120 = arith.mulf %105, %119 : vector<2x256xf32>
    %121 = arith.addf %101, %120 : vector<2x256xf32>
    %c241_i32 = arith.constant 241 : i32
    %122 = tpu.dynamic_rotate %5 by %c241_i32 dim 1 : vector<2x256xf32>, i32 -> vector<2x256xf32>
    %123 = vector.extract_strided_slice %0 {offsets = [6, 0], sizes = [1, 256], strides = [1, 1]} : vector<9x256xf32> to vector<1x256xf32>
    %124 = vector.broadcast %123 : vector<1x256xf32> to vector<2x256xf32>
    %125 = arith.mulf %122, %124 : vector<2x256xf32>
    %c6 = arith.constant 6 : index
    %126 = memref.load %arg3[%c6] : memref<72xf32, #tpu.memory_space<smem>>
    %127 = vector.broadcast %126 : f32 to vector<2x256xf32>
    %128 = arith.mulf %125, %127 : vector<2x256xf32>
    %129 = arith.addf %109, %128 : vector<2x256xf32>
    %c24 = arith.constant 24 : index
    %130 = memref.load %arg3[%c24] : memref<72xf32, #tpu.memory_space<smem>>
    %131 = vector.broadcast %130 : f32 to vector<2x256xf32>
    %132 = arith.mulf %125, %131 : vector<2x256xf32>
    %133 = arith.addf %113, %132 : vector<2x256xf32>
    %c42 = arith.constant 42 : index
    %134 = memref.load %arg3[%c42] : memref<72xf32, #tpu.memory_space<smem>>
    %135 = vector.broadcast %134 : f32 to vector<2x256xf32>
    %136 = arith.mulf %125, %135 : vector<2x256xf32>
    %137 = arith.addf %117, %136 : vector<2x256xf32>
    %c60 = arith.constant 60 : index
    %138 = memref.load %arg3[%c60] : memref<72xf32, #tpu.memory_space<smem>>
    %139 = vector.broadcast %138 : f32 to vector<2x256xf32>
    %140 = arith.mulf %125, %139 : vector<2x256xf32>
    %141 = arith.addf %121, %140 : vector<2x256xf32>
    %c240_i32 = arith.constant 240 : i32
    %142 = tpu.dynamic_rotate %5 by %c240_i32 dim 1 : vector<2x256xf32>, i32 -> vector<2x256xf32>
    %143 = vector.extract_strided_slice %0 {offsets = [7, 0], sizes = [1, 256], strides = [1, 1]} : vector<9x256xf32> to vector<1x256xf32>
    %144 = vector.broadcast %143 : vector<1x256xf32> to vector<2x256xf32>
    %145 = arith.mulf %142, %144 : vector<2x256xf32>
    %c7 = arith.constant 7 : index
    %146 = memref.load %arg3[%c7] : memref<72xf32, #tpu.memory_space<smem>>
    %147 = vector.broadcast %146 : f32 to vector<2x256xf32>
    %148 = arith.mulf %145, %147 : vector<2x256xf32>
    %149 = arith.addf %129, %148 : vector<2x256xf32>
    %c25 = arith.constant 25 : index
    %150 = memref.load %arg3[%c25] : memref<72xf32, #tpu.memory_space<smem>>
    %151 = vector.broadcast %150 : f32 to vector<2x256xf32>
    %152 = arith.mulf %145, %151 : vector<2x256xf32>
    %153 = arith.addf %133, %152 : vector<2x256xf32>
    %c43 = arith.constant 43 : index
    %154 = memref.load %arg3[%c43] : memref<72xf32, #tpu.memory_space<smem>>
    %155 = vector.broadcast %154 : f32 to vector<2x256xf32>
    %156 = arith.mulf %145, %155 : vector<2x256xf32>
    %157 = arith.addf %137, %156 : vector<2x256xf32>
    %c61 = arith.constant 61 : index
    %158 = memref.load %arg3[%c61] : memref<72xf32, #tpu.memory_space<smem>>
    %159 = vector.broadcast %158 : f32 to vector<2x256xf32>
    %160 = arith.mulf %145, %159 : vector<2x256xf32>
    %161 = arith.addf %141, %160 : vector<2x256xf32>
    %c239_i32 = arith.constant 239 : i32
    %162 = tpu.dynamic_rotate %5 by %c239_i32 dim 1 : vector<2x256xf32>, i32 -> vector<2x256xf32>
    %163 = vector.extract_strided_slice %0 {offsets = [8, 0], sizes = [1, 256], strides = [1, 1]} : vector<9x256xf32> to vector<1x256xf32>
    %164 = vector.broadcast %163 : vector<1x256xf32> to vector<2x256xf32>
    %165 = arith.mulf %162, %164 : vector<2x256xf32>
    %c8 = arith.constant 8 : index
    %166 = memref.load %arg3[%c8] : memref<72xf32, #tpu.memory_space<smem>>
    %167 = vector.broadcast %166 : f32 to vector<2x256xf32>
    %168 = arith.mulf %165, %167 : vector<2x256xf32>
    %169 = arith.addf %149, %168 : vector<2x256xf32>
    %c26 = arith.constant 26 : index
    %170 = memref.load %arg3[%c26] : memref<72xf32, #tpu.memory_space<smem>>
    %171 = vector.broadcast %170 : f32 to vector<2x256xf32>
    %172 = arith.mulf %165, %171 : vector<2x256xf32>
    %173 = arith.addf %153, %172 : vector<2x256xf32>
    %c44 = arith.constant 44 : index
    %174 = memref.load %arg3[%c44] : memref<72xf32, #tpu.memory_space<smem>>
    %175 = vector.broadcast %174 : f32 to vector<2x256xf32>
    %176 = arith.mulf %165, %175 : vector<2x256xf32>
    %177 = arith.addf %157, %176 : vector<2x256xf32>
    %c62 = arith.constant 62 : index
    %178 = memref.load %arg3[%c62] : memref<72xf32, #tpu.memory_space<smem>>
    %179 = vector.broadcast %178 : f32 to vector<2x256xf32>
    %180 = arith.mulf %165, %179 : vector<2x256xf32>
    %181 = arith.addf %161, %180 : vector<2x256xf32>
    %c0_7 = arith.constant 0 : index
    %c256 = arith.constant 256 : index
    %182 = vector.load %arg1[%c0_7, %c256] : memref<2x1024xf32, #tpu.memory_space<vmem>>, vector<2x256xf32>
    %c17_i32_8 = arith.constant 17 : i32
    %183 = tpu.dynamic_rotate %182 by %c17_i32_8 dim 1 : vector<2x256xf32>, i32 -> vector<2x256xf32>
    %184 = vector.extract_strided_slice %0 {offsets = [0, 0], sizes = [1, 256], strides = [1, 1]} : vector<9x256xf32> to vector<1x256xf32>
    %185 = vector.broadcast %184 : vector<1x256xf32> to vector<2x256xf32>
    %186 = arith.mulf %183, %185 : vector<2x256xf32>
    %c9 = arith.constant 9 : index
    %187 = memref.load %arg3[%c9] : memref<72xf32, #tpu.memory_space<smem>>
    %188 = vector.broadcast %187 : f32 to vector<2x256xf32>
    %189 = arith.mulf %186, %188 : vector<2x256xf32>
    %190 = arith.addf %169, %189 : vector<2x256xf32>
    %c27 = arith.constant 27 : index
    %191 = memref.load %arg3[%c27] : memref<72xf32, #tpu.memory_space<smem>>
    %192 = vector.broadcast %191 : f32 to vector<2x256xf32>
    %193 = arith.mulf %186, %192 : vector<2x256xf32>
    %194 = arith.addf %173, %193 : vector<2x256xf32>
    %c45 = arith.constant 45 : index
    %195 = memref.load %arg3[%c45] : memref<72xf32, #tpu.memory_space<smem>>
    %196 = vector.broadcast %195 : f32 to vector<2x256xf32>
    %197 = arith.mulf %186, %196 : vector<2x256xf32>
    %198 = arith.addf %177, %197 : vector<2x256xf32>
    %c63 = arith.constant 63 : index
    %199 = memref.load %arg3[%c63] : memref<72xf32, #tpu.memory_space<smem>>
    %200 = vector.broadcast %199 : f32 to vector<2x256xf32>
    %201 = arith.mulf %186, %200 : vector<2x256xf32>
    %202 = arith.addf %181, %201 : vector<2x256xf32>
    %c16_i32_9 = arith.constant 16 : i32
    %203 = tpu.dynamic_rotate %182 by %c16_i32_9 dim 1 : vector<2x256xf32>, i32 -> vector<2x256xf32>
    %204 = vector.extract_strided_slice %0 {offsets = [1, 0], sizes = [1, 256], strides = [1, 1]} : vector<9x256xf32> to vector<1x256xf32>
    %205 = vector.broadcast %204 : vector<1x256xf32> to vector<2x256xf32>
    %206 = arith.mulf %203, %205 : vector<2x256xf32>
    %c10 = arith.constant 10 : index
    %207 = memref.load %arg3[%c10] : memref<72xf32, #tpu.memory_space<smem>>
    %208 = vector.broadcast %207 : f32 to vector<2x256xf32>
    %209 = arith.mulf %206, %208 : vector<2x256xf32>
    %210 = arith.addf %190, %209 : vector<2x256xf32>
    %c28 = arith.constant 28 : index
    %211 = memref.load %arg3[%c28] : memref<72xf32, #tpu.memory_space<smem>>
    %212 = vector.broadcast %211 : f32 to vector<2x256xf32>
    %213 = arith.mulf %206, %212 : vector<2x256xf32>
    %214 = arith.addf %194, %213 : vector<2x256xf32>
    %c46 = arith.constant 46 : index
    %215 = memref.load %arg3[%c46] : memref<72xf32, #tpu.memory_space<smem>>
    %216 = vector.broadcast %215 : f32 to vector<2x256xf32>
    %217 = arith.mulf %206, %216 : vector<2x256xf32>
    %218 = arith.addf %198, %217 : vector<2x256xf32>
    %c64 = arith.constant 64 : index
    %219 = memref.load %arg3[%c64] : memref<72xf32, #tpu.memory_space<smem>>
    %220 = vector.broadcast %219 : f32 to vector<2x256xf32>
    %221 = arith.mulf %206, %220 : vector<2x256xf32>
    %222 = arith.addf %202, %221 : vector<2x256xf32>
    %c15_i32_10 = arith.constant 15 : i32
    %223 = tpu.dynamic_rotate %182 by %c15_i32_10 dim 1 : vector<2x256xf32>, i32 -> vector<2x256xf32>
    %224 = vector.extract_strided_slice %0 {offsets = [2, 0], sizes = [1, 256], strides = [1, 1]} : vector<9x256xf32> to vector<1x256xf32>
    %225 = vector.broadcast %224 : vector<1x256xf32> to vector<2x256xf32>
    %226 = arith.mulf %223, %225 : vector<2x256xf32>
    %c11 = arith.constant 11 : index
    %227 = memref.load %arg3[%c11] : memref<72xf32, #tpu.memory_space<smem>>
    %228 = vector.broadcast %227 : f32 to vector<2x256xf32>
    %229 = arith.mulf %226, %228 : vector<2x256xf32>
    %230 = arith.addf %210, %229 : vector<2x256xf32>
    %c29 = arith.constant 29 : index
    %231 = memref.load %arg3[%c29] : memref<72xf32, #tpu.memory_space<smem>>
    %232 = vector.broadcast %231 : f32 to vector<2x256xf32>
    %233 = arith.mulf %226, %232 : vector<2x256xf32>
    %234 = arith.addf %214, %233 : vector<2x256xf32>
    %c47 = arith.constant 47 : index
    %235 = memref.load %arg3[%c47] : memref<72xf32, #tpu.memory_space<smem>>
    %236 = vector.broadcast %235 : f32 to vector<2x256xf32>
    %237 = arith.mulf %226, %236 : vector<2x256xf32>
    %238 = arith.addf %218, %237 : vector<2x256xf32>
    %c65 = arith.constant 65 : index
    %239 = memref.load %arg3[%c65] : memref<72xf32, #tpu.memory_space<smem>>
    %240 = vector.broadcast %239 : f32 to vector<2x256xf32>
    %241 = arith.mulf %226, %240 : vector<2x256xf32>
    %242 = arith.addf %222, %241 : vector<2x256xf32>
    %c1_i32_11 = arith.constant 1 : i32
    %243 = tpu.dynamic_rotate %182 by %c1_i32_11 dim 1 : vector<2x256xf32>, i32 -> vector<2x256xf32>
    %244 = vector.extract_strided_slice %0 {offsets = [3, 0], sizes = [1, 256], strides = [1, 1]} : vector<9x256xf32> to vector<1x256xf32>
    %245 = vector.broadcast %244 : vector<1x256xf32> to vector<2x256xf32>
    %246 = arith.mulf %243, %245 : vector<2x256xf32>
    %c12 = arith.constant 12 : index
    %247 = memref.load %arg3[%c12] : memref<72xf32, #tpu.memory_space<smem>>
    %248 = vector.broadcast %247 : f32 to vector<2x256xf32>
    %249 = arith.mulf %246, %248 : vector<2x256xf32>
    %250 = arith.addf %230, %249 : vector<2x256xf32>
    %c30 = arith.constant 30 : index
    %251 = memref.load %arg3[%c30] : memref<72xf32, #tpu.memory_space<smem>>
    %252 = vector.broadcast %251 : f32 to vector<2x256xf32>
    %253 = arith.mulf %246, %252 : vector<2x256xf32>
    %254 = arith.addf %234, %253 : vector<2x256xf32>
    %c48 = arith.constant 48 : index
    %255 = memref.load %arg3[%c48] : memref<72xf32, #tpu.memory_space<smem>>
    %256 = vector.broadcast %255 : f32 to vector<2x256xf32>
    %257 = arith.mulf %246, %256 : vector<2x256xf32>
    %258 = arith.addf %238, %257 : vector<2x256xf32>
    %c66 = arith.constant 66 : index
    %259 = memref.load %arg3[%c66] : memref<72xf32, #tpu.memory_space<smem>>
    %260 = vector.broadcast %259 : f32 to vector<2x256xf32>
    %261 = arith.mulf %246, %260 : vector<2x256xf32>
    %262 = arith.addf %242, %261 : vector<2x256xf32>
    %c13 = arith.constant 13 : index
    %263 = memref.load %arg3[%c13] : memref<72xf32, #tpu.memory_space<smem>>
    %264 = vector.broadcast %263 : f32 to vector<2x256xf32>
    %265 = arith.mulf %182, %264 : vector<2x256xf32>
    %266 = arith.addf %250, %265 : vector<2x256xf32>
    %c31 = arith.constant 31 : index
    %267 = memref.load %arg3[%c31] : memref<72xf32, #tpu.memory_space<smem>>
    %268 = vector.broadcast %267 : f32 to vector<2x256xf32>
    %269 = arith.mulf %182, %268 : vector<2x256xf32>
    %270 = arith.addf %254, %269 : vector<2x256xf32>
    %c49 = arith.constant 49 : index
    %271 = memref.load %arg3[%c49] : memref<72xf32, #tpu.memory_space<smem>>
    %272 = vector.broadcast %271 : f32 to vector<2x256xf32>
    %273 = arith.mulf %182, %272 : vector<2x256xf32>
    %274 = arith.addf %258, %273 : vector<2x256xf32>
    %c67 = arith.constant 67 : index
    %275 = memref.load %arg3[%c67] : memref<72xf32, #tpu.memory_space<smem>>
    %276 = vector.broadcast %275 : f32 to vector<2x256xf32>
    %277 = arith.mulf %182, %276 : vector<2x256xf32>
    %278 = arith.addf %262, %277 : vector<2x256xf32>
    %c255_i32_12 = arith.constant 255 : i32
    %279 = tpu.dynamic_rotate %182 by %c255_i32_12 dim 1 : vector<2x256xf32>, i32 -> vector<2x256xf32>
    %280 = vector.extract_strided_slice %0 {offsets = [5, 0], sizes = [1, 256], strides = [1, 1]} : vector<9x256xf32> to vector<1x256xf32>
    %281 = vector.broadcast %280 : vector<1x256xf32> to vector<2x256xf32>
    %282 = arith.mulf %279, %281 : vector<2x256xf32>
    %c14 = arith.constant 14 : index
    %283 = memref.load %arg3[%c14] : memref<72xf32, #tpu.memory_space<smem>>
    %284 = vector.broadcast %283 : f32 to vector<2x256xf32>
    %285 = arith.mulf %282, %284 : vector<2x256xf32>
    %286 = arith.addf %266, %285 : vector<2x256xf32>
    %c32 = arith.constant 32 : index
    %287 = memref.load %arg3[%c32] : memref<72xf32, #tpu.memory_space<smem>>
    %288 = vector.broadcast %287 : f32 to vector<2x256xf32>
    %289 = arith.mulf %282, %288 : vector<2x256xf32>
    %290 = arith.addf %270, %289 : vector<2x256xf32>
    %c50 = arith.constant 50 : index
    %291 = memref.load %arg3[%c50] : memref<72xf32, #tpu.memory_space<smem>>
    %292 = vector.broadcast %291 : f32 to vector<2x256xf32>
    %293 = arith.mulf %282, %292 : vector<2x256xf32>
    %294 = arith.addf %274, %293 : vector<2x256xf32>
    %c68 = arith.constant 68 : index
    %295 = memref.load %arg3[%c68] : memref<72xf32, #tpu.memory_space<smem>>
    %296 = vector.broadcast %295 : f32 to vector<2x256xf32>
    %297 = arith.mulf %282, %296 : vector<2x256xf32>
    %298 = arith.addf %278, %297 : vector<2x256xf32>
    %c241_i32_13 = arith.constant 241 : i32
    %299 = tpu.dynamic_rotate %182 by %c241_i32_13 dim 1 : vector<2x256xf32>, i32 -> vector<2x256xf32>
    %300 = vector.extract_strided_slice %0 {offsets = [6, 0], sizes = [1, 256], strides = [1, 1]} : vector<9x256xf32> to vector<1x256xf32>
    %301 = vector.broadcast %300 : vector<1x256xf32> to vector<2x256xf32>
    %302 = arith.mulf %299, %301 : vector<2x256xf32>
    %c15 = arith.constant 15 : index
    %303 = memref.load %arg3[%c15] : memref<72xf32, #tpu.memory_space<smem>>
    %304 = vector.broadcast %303 : f32 to vector<2x256xf32>
    %305 = arith.mulf %302, %304 : vector<2x256xf32>
    %306 = arith.addf %286, %305 : vector<2x256xf32>
    %c33 = arith.constant 33 : index
    %307 = memref.load %arg3[%c33] : memref<72xf32, #tpu.memory_space<smem>>
    %308 = vector.broadcast %307 : f32 to vector<2x256xf32>
    %309 = arith.mulf %302, %308 : vector<2x256xf32>
    %310 = arith.addf %290, %309 : vector<2x256xf32>
    %c51 = arith.constant 51 : index
    %311 = memref.load %arg3[%c51] : memref<72xf32, #tpu.memory_space<smem>>
    %312 = vector.broadcast %311 : f32 to vector<2x256xf32>
    %313 = arith.mulf %302, %312 : vector<2x256xf32>
    %314 = arith.addf %294, %313 : vector<2x256xf32>
    %c69 = arith.constant 69 : index
    %315 = memref.load %arg3[%c69] : memref<72xf32, #tpu.memory_space<smem>>
    %316 = vector.broadcast %315 : f32 to vector<2x256xf32>
    %317 = arith.mulf %302, %316 : vector<2x256xf32>
    %318 = arith.addf %298, %317 : vector<2x256xf32>
    %c240_i32_14 = arith.constant 240 : i32
    %319 = tpu.dynamic_rotate %182 by %c240_i32_14 dim 1 : vector<2x256xf32>, i32 -> vector<2x256xf32>
    %320 = vector.extract_strided_slice %0 {offsets = [7, 0], sizes = [1, 256], strides = [1, 1]} : vector<9x256xf32> to vector<1x256xf32>
    %321 = vector.broadcast %320 : vector<1x256xf32> to vector<2x256xf32>
    %322 = arith.mulf %319, %321 : vector<2x256xf32>
    %c16 = arith.constant 16 : index
    %323 = memref.load %arg3[%c16] : memref<72xf32, #tpu.memory_space<smem>>
    %324 = vector.broadcast %323 : f32 to vector<2x256xf32>
    %325 = arith.mulf %322, %324 : vector<2x256xf32>
    %326 = arith.addf %306, %325 : vector<2x256xf32>
    %c34 = arith.constant 34 : index
    %327 = memref.load %arg3[%c34] : memref<72xf32, #tpu.memory_space<smem>>
    %328 = vector.broadcast %327 : f32 to vector<2x256xf32>
    %329 = arith.mulf %322, %328 : vector<2x256xf32>
    %330 = arith.addf %310, %329 : vector<2x256xf32>
    %c52 = arith.constant 52 : index
    %331 = memref.load %arg3[%c52] : memref<72xf32, #tpu.memory_space<smem>>
    %332 = vector.broadcast %331 : f32 to vector<2x256xf32>
    %333 = arith.mulf %322, %332 : vector<2x256xf32>
    %334 = arith.addf %314, %333 : vector<2x256xf32>
    %c70 = arith.constant 70 : index
    %335 = memref.load %arg3[%c70] : memref<72xf32, #tpu.memory_space<smem>>
    %336 = vector.broadcast %335 : f32 to vector<2x256xf32>
    %337 = arith.mulf %322, %336 : vector<2x256xf32>
    %338 = arith.addf %318, %337 : vector<2x256xf32>
    %c239_i32_15 = arith.constant 239 : i32
    %339 = tpu.dynamic_rotate %182 by %c239_i32_15 dim 1 : vector<2x256xf32>, i32 -> vector<2x256xf32>
    %340 = vector.extract_strided_slice %0 {offsets = [8, 0], sizes = [1, 256], strides = [1, 1]} : vector<9x256xf32> to vector<1x256xf32>
    %341 = vector.broadcast %340 : vector<1x256xf32> to vector<2x256xf32>
    %342 = arith.mulf %339, %341 : vector<2x256xf32>
    %c17 = arith.constant 17 : index
    %343 = memref.load %arg3[%c17] : memref<72xf32, #tpu.memory_space<smem>>
    %344 = vector.broadcast %343 : f32 to vector<2x256xf32>
    %345 = arith.mulf %342, %344 : vector<2x256xf32>
    %346 = arith.addf %326, %345 : vector<2x256xf32>
    %c35 = arith.constant 35 : index
    %347 = memref.load %arg3[%c35] : memref<72xf32, #tpu.memory_space<smem>>
    %348 = vector.broadcast %347 : f32 to vector<2x256xf32>
    %349 = arith.mulf %342, %348 : vector<2x256xf32>
    %350 = arith.addf %330, %349 : vector<2x256xf32>
    %c53 = arith.constant 53 : index
    %351 = memref.load %arg3[%c53] : memref<72xf32, #tpu.memory_space<smem>>
    %352 = vector.broadcast %351 : f32 to vector<2x256xf32>
    %353 = arith.mulf %342, %352 : vector<2x256xf32>
    %354 = arith.addf %334, %353 : vector<2x256xf32>
    %c71 = arith.constant 71 : index
    %355 = memref.load %arg3[%c71] : memref<72xf32, #tpu.memory_space<smem>>
    %356 = vector.broadcast %355 : f32 to vector<2x256xf32>
    %357 = arith.mulf %342, %356 : vector<2x256xf32>
    %358 = arith.addf %338, %357 : vector<2x256xf32>
    %cst_16 = arith.constant 0.000000e+00 : f32
    %359 = vector.broadcast %cst_16 : f32 to vector<2x256xf32>
    %c0_17 = arith.constant 0 : index
    %360 = memref.load %arg4[%c0_17] : memref<4xf32, #tpu.memory_space<smem>>
    %361 = vector.broadcast %360 : f32 to vector<2x256xf32>
    %362 = arith.addf %346, %361 : vector<2x256xf32>
    %c1_18 = arith.constant 1 : index
    %363 = memref.load %arg4[%c1_18] : memref<4xf32, #tpu.memory_space<smem>>
    %364 = vector.broadcast %363 : f32 to vector<2x256xf32>
    %365 = arith.addf %350, %364 : vector<2x256xf32>
    %c0_19 = arith.constant 0 : index
    %c512 = arith.constant 512 : index
    %366 = vector.load %arg1[%c0_19, %c512] : memref<2x1024xf32, #tpu.memory_space<vmem>>, vector<2x256xf32>
    %367 = arith.subf %366, %362 : vector<2x256xf32>
    %368 = arith.subf %359, %365 : vector<2x256xf32>
    %369 = arith.mulf %367, %367 : vector<2x256xf32>
    %cst_20 = arith.constant 5.000000e-01 : f32
    %370 = vector.broadcast %cst_20 : f32 to vector<2x256xf32>
    %371 = arith.mulf %370, %369 : vector<2x256xf32>
    %cst_21 = arith.constant -2.000000e+00 : f32
    %372 = vector.broadcast %cst_21 : f32 to vector<2x256xf32>
    %373 = arith.mulf %372, %365 : vector<2x256xf32>
    %374 = math.exp %373 : vector<2x256xf32>
    %375 = arith.mulf %371, %374 : vector<2x256xf32>
    %376 = arith.subf %368, %375 : vector<2x256xf32>
    %c2_22 = arith.constant 2 : index
    %377 = memref.load %arg4[%c2_22] : memref<4xf32, #tpu.memory_space<smem>>
    %378 = vector.broadcast %377 : f32 to vector<2x256xf32>
    %379 = arith.addf %354, %378 : vector<2x256xf32>
    %c3_23 = arith.constant 3 : index
    %380 = memref.load %arg4[%c3_23] : memref<4xf32, #tpu.memory_space<smem>>
    %381 = vector.broadcast %380 : f32 to vector<2x256xf32>
    %382 = arith.addf %358, %381 : vector<2x256xf32>
    %c0_24 = arith.constant 0 : index
    %c768 = arith.constant 768 : index
    %383 = vector.load %arg1[%c0_24, %c768] : memref<2x1024xf32, #tpu.memory_space<vmem>>, vector<2x256xf32>
    %384 = arith.subf %383, %379 : vector<2x256xf32>
    %385 = arith.subf %376, %382 : vector<2x256xf32>
    %386 = arith.mulf %384, %384 : vector<2x256xf32>
    %cst_25 = arith.constant 5.000000e-01 : f32
    %387 = vector.broadcast %cst_25 : f32 to vector<2x256xf32>
    %388 = arith.mulf %387, %386 : vector<2x256xf32>
    %cst_26 = arith.constant -2.000000e+00 : f32
    %389 = vector.broadcast %cst_26 : f32 to vector<2x256xf32>
    %390 = arith.mulf %389, %382 : vector<2x256xf32>
    %391 = math.exp %390 : vector<2x256xf32>
    %392 = arith.mulf %388, %391 : vector<2x256xf32>
    %393 = arith.subf %385, %392 : vector<2x256xf32>
    %cst_27 = arith.constant dense<0.000000e+00> : vector<2xf32>
    %394 = vector.multi_reduction <add>, %393, %cst_27 [1] : vector<2x256xf32> to vector<2xf32>
    %395 = vector.shape_cast %394 : vector<2xf32> to vector<2x1xf32>
    %cst_28 = arith.constant 470.496521 : f32
    %396 = vector.broadcast %cst_28 : f32 to vector<2x1xf32>
    %397 = arith.subf %395, %396 : vector<2x1xf32>
    %398 = vector.shape_cast %397 : vector<2x1xf32> to vector<2x1xf32>
    %399 = vector.broadcast %398 : vector<2x1xf32> to vector<2x128xf32>
    %c0_29 = arith.constant 0 : index
    %c0_30 = arith.constant 0 : index
    %400 = vector.load %arg5[%c0_29, %c0_30] : memref<2x128xf32, #tpu.memory_space<vmem>>, vector<2x128xf32>
    tpu.vector_store %arg5[%c0_29, %c0_30], %399 {strides = array<i32>} : memref<2x128xf32, #tpu.memory_space<vmem>>, vector<2x128xf32>,
    return
  }
  func.func @transform_0(%arg0: i32) -> (i32, i32) {
    %c0_i32 = arith.constant 0 : i32
    %c0_i32_0 = arith.constant 0 : i32
    return %arg0, %c0_i32 : i32, i32
  }
  func.func @transform_1(%arg0: i32) -> (i32, i32) {
    %c0_i32 = arith.constant 0 : i32
    %c0_i32_0 = arith.constant 0 : i32
    %c0_i32_1 = arith.constant 0 : i32
    return %c0_i32, %c0_i32_0 : i32, i32
  }
  func.func @transform_2(%arg0: i32) -> i32 {
    %c0_i32 = arith.constant 0 : i32
    %c0_i32_0 = arith.constant 0 : i32
    return %c0_i32 : i32
  }
  func.func @transform_3(%arg0: i32) -> i32 {
    %c0_i32 = arith.constant 0 : i32
    %c0_i32_0 = arith.constant 0 : i32
    return %c0_i32 : i32
  }
  func.func @transform_4(%arg0: i32) -> (i32, i32) {
    %c0_i32 = arith.constant 0 : i32
    %c0_i32_0 = arith.constant 0 : i32
    return %arg0, %c0_i32 : i32, i32
  }
}

</mosaic_0001>

<llo_original>
// kernel: tpu_custom_call.1
$region0: #{tpu_custom_call.1}
  #allocation0 [shape = 'u32[]', space=smem, size = 0x4, offset = 0x4, fixed_abs, tag = 'smem constant byte address 0x4 - core index']
  #allocation1 [shape = 'u32[144,128]{1,0:T(1,128)}', space=vmem, size = 0x12000, scoped, tag = 'internal scratch']
  %s0 = inlined_call_operand.hbm [shape: f32[2,1024], index: 0, kind: input, shape index: {}]
  %s1 = inlined_call_operand.hbm [shape: f32[9,256], index: 1, kind: input, shape index: {}]
  %s2 = inlined_call_operand.vmem [shape: f32[72], index: 2, kind: input, shape index: {}]
  %s3 = inlined_call_operand.vmem [shape: f32[4], index: 3, kind: input, shape index: {}]
  %s4 = inlined_call_operand.hbm [shape: f32[2,128], index: 4, kind: output, shape index: {}]
  %s5 = sld [smem:[#allocation0]]
  $region42: #{tpu_custom_call.1} parent=0
    _
  %s7 = ssub.s32 1, %s5
  %s8 = scalar_select 0, %s7, %s5
  $region1: #{tpu_custom_call.1} parent=0
    #allocation2 [shape = 'u8[8192]{0}', space=vmem, size = 0x2000, scoped, tag = 'input window, operand 0, single buffered']
    #allocation3 [shape = 's32[1]{0}', space=sflag, size = 0x4, scoped, tag = 'scoped memory for tpu_custom_call.1']
    #allocation4 [shape = 's32[1]{0}', space=sflag, size = 0x4, scoped, tag = 'scoped memory for tpu_custom_call.1']
    #allocation5 [shape = 's32[1]{0}', space=sflag, size = 0x4, scoped, tag = 'scoped memory for tpu_custom_call.1']
    #allocation6 [shape = 'u8[16384]{0}', space=vmem, size = 0x4000, scoped, tag = 'input window, operand 1, single buffered']
    #allocation7 [shape = 's32[1]{0}', space=sflag, size = 0x4, scoped, tag = 'scoped memory for tpu_custom_call.1']
    #allocation8 [shape = 'u8[512]{0}', space=smem, size = 0x200, scoped, tag = 'input window, operand 2, single buffered']
    #allocation9 [shape = 'u8[512]{0}', space=smem, size = 0x200, scoped, tag = 'input window, operand 3, single buffered']
    #allocation10 [shape = 's32[1]{0}', space=sflag, size = 0x4, scoped, tag = 'scoped memory for tpu_custom_call.1']
    #allocation11 [shape = 'u8[1024]{0}', space=vmem, size = 0x400, scoped, tag = 'output window, operand 0, single buffered']
    %9 = vsyncpa [#allocation3], 0
    %10 = vsyncpa [#allocation7], 0
    %11 = vsyncpa [#allocation5], 0
    %12 = vsyncpa [#allocation10], 0
    %13 = vsyncpa [#allocation4], 0
    // Predicated region
    $region2: #{tpu_custom_call.1} parent=1 // pred_check
      _
    $region3: #{tpu_custom_call.1} parent=1 // pred_check_branch
      %15 = sbr.rel (0) target = $region5
    $region4: #{tpu_custom_call.1} parent=1 // pred_region
      %s17 = ssub.s32 256, 256
      %18 = vsyncadd [#allocation3], %s17
      %s20 = sshll.u32 [#allocation2], 4
      %s21 = int_to_ptr.vmem [resolvable:$true] %s20
      %23 = dma.hbm_to_vmem [thread:$0]  %s0, 256, %s21, [#allocation3]
    $region5: #{tpu_custom_call.1} parent=1 // pred_fallthru
      _
    // Predicated region
    $region6: #{tpu_custom_call.1} parent=1 // pred_check
      _
    $region7: #{tpu_custom_call.1} parent=1 // pred_check_branch
      %25 = sbr.rel (0) target = $region9
    $region8: #{tpu_custom_call.1} parent=1 // pred_region
      %s27 = ssub.s32 512, 512
      %28 = vsyncadd [#allocation7], %s27
      %s29 = sshll.u32 [#allocation6], 4
      %s30 = int_to_ptr.vmem [resolvable:$true] %s29
      %35 = dma.hbm_to_vmem [thread:$0]  %s1, 512, %s30, [#allocation7], 256, 256, 16
    $region9: #{tpu_custom_call.1} parent=1 // pred_fallthru
      _
    // Predicated region
    $region10: #{tpu_custom_call.1} parent=1 // pred_check
      _
    $region11: #{tpu_custom_call.1} parent=1 // pred_check_branch
      %37 = sbr.rel (0) target = $region13
    $region12: #{tpu_custom_call.1} parent=1 // pred_region
      %s39 = ssub.s32 16, 16
      %40 = vsyncadd [#allocation5], %s39
      %s42 = sshll.u32 %s2, 4
      %s43 = int_to_ptr.vmem [resolvable:$true] %s42
      %45 = dma.vmem_to_smem %s43, 16, [#allocation8], [#allocation5]
    $region13: #{tpu_custom_call.1} parent=1 // pred_fallthru
      _
    // Predicated region
    $region14: #{tpu_custom_call.1} parent=1 // pred_check
      _
    $region15: #{tpu_custom_call.1} parent=1 // pred_check_branch
      %47 = sbr.rel (0) target = $region17
    $region16: #{tpu_custom_call.1} parent=1 // pred_region
      %s49 = ssub.s32 16, 16
      %50 = vsyncadd [#allocation10], %s49
      %s52 = sshll.u32 %s3, 4
      %s53 = int_to_ptr.vmem [resolvable:$true] %s52
      %55 = dma.vmem_to_smem %s53, 16, [#allocation9], [#allocation10]
    $region17: #{tpu_custom_call.1} parent=1 // pred_fallthru
      _
    // Predicated region
    $region18: #{tpu_custom_call.1} parent=1 // pred_check
      _
    $region19: #{tpu_custom_call.1} parent=1 // pred_check_branch
      %57 = sbr.rel (0) target = $region21
    $region20: #{tpu_custom_call.1} parent=1 // pred_region
      %58 = dma.done [#allocation3], 256
    $region21: #{tpu_custom_call.1} parent=1 // pred_fallthru
      _
    // Predicated region
    $region22: #{tpu_custom_call.1} parent=1 // pred_check
      _
    $region23: #{tpu_custom_call.1} parent=1 // pred_check_branch
      %60 = sbr.rel (0) target = $region25
    $region24: #{tpu_custom_call.1} parent=1 // pred_region
      %61 = dma.done [#allocation7], 512
    $region25: #{tpu_custom_call.1} parent=1 // pred_fallthru
      _
    // Predicated region
    $region26: #{tpu_custom_call.1} parent=1 // pred_check
      _
    $region27: #{tpu_custom_call.1} parent=1 // pred_check_branch
      %63 = sbr.rel (0) target = $region29
    $region28: #{tpu_custom_call.1} parent=1 // pred_region
      %64 = dma.done [#allocation5], 16
    $region29: #{tpu_custom_call.1} parent=1 // pred_fallthru
      _
    // Predicated region
    $region30: #{tpu_custom_call.1} parent=1 // pred_check
      _
    $region31: #{tpu_custom_call.1} parent=1 // pred_check_branch
      %66 = sbr.rel (0) target = $region33
    $region32: #{tpu_custom_call.1} parent=1 // pred_region
      %67 = dma.done [#allocation10], 16
    $region33: #{tpu_custom_call.1} parent=1 // pred_fallthru
      _
    %68 = sfence
    %v69 = vld [vmem:[#allocation6] sm:$0xff]
    %v70 = vld [vmem:[#allocation6 + $0x8] sm:$0xff]
    %v71 = vld [vmem:[#allocation6 + $0x10] sm:$0x1]
    %v72 = vld [vmem:[#allocation6 + $0x18] sm:$0x1]
    %v73 = vld [vmem:[#allocation2] sm:$0xf]
    %v76 = vunpack.c.l.s4 1983009808
    %v77 = vunpack.c.0.s8 %v76
    %v78 = vlaneseq
    %v79 = vshrl.u32 %v78, 7
    %v80 = vsub.s32 %v77, %v79
    %v81 = vrot.slane %v73, %v80
    %v82 = vcombine.high %v81, %v81
    %85 = vrot.lane.b32.xlu0 %v81, 17
    %v86 = vpop.permute.xlu0 %85
    %87 = vrot.lane.b32.xlu0 %v82, 17
    %v88 = vpop.permute.xlu0 %87
    %v89 = vlaneseq
    %v90 = vand.u32 %v89, 127
    %vm91 = vcmp.lt.s32.totalorder %v90, 17
    %v92 = vsel %vm91, %v86, %v88
    %v93 = vsel %vm91, %v88, %v86
    %v94 = vlaneseq
    %v95 = vshrl.u32 %v94, 7
    %v96 = vsub.s32 0, %v95
    %v97 = vrot.slane %v69, %v96
    %v98 = vlaneseq
    %v99 = vshrl.u32 %v98, 7
    %v100 = vsub.s32 0, %v99
    %v101 = vrot.slane %v70, %v100
    %v102 = vmul.f32 %v93, %v97
    %v103 = vmul.f32 %v92, %v101
    %s104 = sld [smem:[#allocation8]]
    %v105 = vstv %s104
    %v106 = vmul.f32 %v102, %v105
    %v107 = vmul.f32 %v103, %v105
    %v108 = vadd.f32 %v106, 0.0
    %v109 = vadd.f32 %v107, 0.0
    %s110 = sld [smem:[#allocation8 + $0x12]]
    %v111 = vstv %s110
    %v112 = vmul.f32 %v102, %v111
    %v113 = vmul.f32 %v103, %v111
    %v114 = vadd.f32 %v112, 0.0
    %v115 = vadd.f32 %v113, 0.0
    %s116 = sld [smem:[#allocation8 + $0x24]]
    %v117 = vstv %s116
    %v118 = vmul.f32 %v102, %v117
    %v119 = vmul.f32 %v103, %v117
    %v120 = vadd.f32 %v118, 0.0
    %v121 = vadd.f32 %v119, 0.0
    %s122 = sld [smem:[#allocation8 + $0x36]]
    %v123 = vstv %s122
    %v124 = vmul.f32 %v102, %v123
    %v125 = vmul.f32 %v103, %v123
    %v126 = vadd.f32 %v124, 0.0
    %v127 = vadd.f32 %v125, 0.0
    %128 = vrot.lane.b32.xlu0 %v81, 16
    %v129 = vpop.permute.xlu0 %128
    %130 = vrot.lane.b32.xlu0 %v82, 16
    %v131 = vpop.permute.xlu0 %130
    %vm132 = vcmp.lt.s32.totalorder %v90, 16
    %v133 = vsel %vm132, %v129, %v131
    %v134 = vsel %vm132, %v131, %v129
    %v135 = vlaneseq
    %v136 = vshrl.u32 %v135, 7
    %v137 = vsub.s32 1, %v136
    %v138 = vrot.slane %v69, %v137
    %v139 = vlaneseq
    %v140 = vshrl.u32 %v139, 7
    %v141 = vsub.s32 1, %v140
    %v142 = vrot.slane %v70, %v141
    %v143 = vmul.f32 %v134, %v138
    %v144 = vmul.f32 %v133, %v142
    %s145 = sld [smem:[#allocation8 + $0x1]]
    %v146 = vstv %s145
    %v147 = vmul.f32 %v143, %v146
    %v148 = vmul.f32 %v144, %v146
    %v149 = vadd.f32 %v108, %v147
    %v150 = vadd.f32 %v109, %v148
    %s151 = sld [smem:[#allocation8 + $0x13]]
    %v152 = vstv %s151
    %v153 = vmul.f32 %v143, %v152
    %v154 = vmul.f32 %v144, %v152
    %v155 = vadd.f32 %v114, %v153
    %v156 = vadd.f32 %v115, %v154
    %s157 = sld [smem:[#allocation8 + $0x25]]
    %v158 = vstv %s157
    %v159 = vmul.f32 %v143, %v158
    %v160 = vmul.f32 %v144, %v158
    %v161 = vadd.f32 %v120, %v159
    %v162 = vadd.f32 %v121, %v160
    %s163 = sld [smem:[#allocation8 + $0x37]]
    %v164 = vstv %s163
    %v165 = vmul.f32 %v143, %v164
    %v166 = vmul.f32 %v144, %v164
    %v167 = vadd.f32 %v126, %v165
    %v168 = vadd.f32 %v127, %v166
    %169 = vrot.lane.b32.xlu0 %v81, 15
    %v170 = vpop.permute.xlu0 %169
    %171 = vrot.lane.b32.xlu0 %v82, 15
    %v172 = vpop.permute.xlu0 %171
    %vm173 = vcmp.lt.s32.totalorder %v90, 15
    %v174 = vsel %vm173, %v170, %v172
    %v175 = vsel %vm173, %v172, %v170
    %v176 = vlaneseq
    %v177 = vshrl.u32 %v176, 7
    %v178 = vsub.s32 2, %v177
    %v179 = vrot.slane %v69, %v178
    %v180 = vlaneseq
    %v181 = vshrl.u32 %v180, 7
    %v182 = vsub.s32 2, %v181
    %v183 = vrot.slane %v70, %v182
    %v184 = vmul.f32 %v175, %v179
    %v185 = vmul.f32 %v174, %v183
    %s186 = sld [smem:[#allocation8 + $0x2]]
    %v187 = vstv %s186
    %v188 = vmul.f32 %v184, %v187
    %v189 = vmul.f32 %v185, %v187
    %v190 = vadd.f32 %v149, %v188
    %v191 = vadd.f32 %v150, %v189
    %s192 = sld [smem:[#allocation8 + $0x14]]
    %v193 = vstv %s192
    %v194 = vmul.f32 %v184, %v193
    %v195 = vmul.f32 %v185, %v193
    %v196 = vadd.f32 %v155, %v194
    %v197 = vadd.f32 %v156, %v195
    %s198 = sld [smem:[#allocation8 + $0x26]]
    %v199 = vstv %s198
    %v200 = vmul.f32 %v184, %v199
    %v201 = vmul.f32 %v185, %v199
    %v202 = vadd.f32 %v161, %v200
    %v203 = vadd.f32 %v162, %v201
    %s204 = sld [smem:[#allocation8 + $0x38]]
    %v205 = vstv %s204
    %v206 = vmul.f32 %v184, %v205
    %v207 = vmul.f32 %v185, %v205
    %v208 = vadd.f32 %v167, %v206
    %v209 = vadd.f32 %v168, %v207
    %210 = vrot.lane.b32.xlu0 %v81, 1
    %v211 = vpop.permute.xlu0 %210
    %212 = vrot.lane.b32.xlu0 %v82, 1
    %v213 = vpop.permute.xlu0 %212
    %vm214 = vcmp.lt.s32.totalorder %v90, 1
    %v215 = vsel %vm214, %v211, %v213
    %v216 = vsel %vm214, %v213, %v211
    %v217 = vlaneseq
    %v218 = vshrl.u32 %v217, 7
    %v219 = vsub.s32 3, %v218
    %v220 = vrot.slane %v69, %v219
    %v221 = vlaneseq
    %v222 = vshrl.u32 %v221, 7
    %v223 = vsub.s32 3, %v222
    %v224 = vrot.slane %v70, %v223
    %v225 = vmul.f32 %v216, %v220
    %v226 = vmul.f32 %v215, %v224
    %s227 = sld [smem:[#allocation8 + $0x3]]
    %v228 = vstv %s227
    %v229 = vmul.f32 %v225, %v228
    %v230 = vmul.f32 %v226, %v228
    %v231 = vadd.f32 %v190, %v229
    %v232 = vadd.f32 %v191, %v230
    %s233 = sld [smem:[#allocation8 + $0x15]]
    %v234 = vstv %s233
    %v235 = vmul.f32 %v225, %v234
    %v236 = vmul.f32 %v226, %v234
    %v237 = vadd.f32 %v196, %v235
    %v238 = vadd.f32 %v197, %v236
    %s239 = sld [smem:[#allocation8 + $0x27]]
    %v240 = vstv %s239
    %v241 = vmul.f32 %v225, %v240
    %v242 = vmul.f32 %v226, %v240
    %v243 = vadd.f32 %v202, %v241
    %v244 = vadd.f32 %v203, %v242
    %s245 = sld [smem:[#allocation8 + $0x39]]
    %v246 = vstv %s245
    %v247 = vmul.f32 %v225, %v246
    %v248 = vmul.f32 %v226, %v246
    %v249 = vadd.f32 %v208, %v247
    %v250 = vadd.f32 %v209, %v248
    %s251 = sld [smem:[#allocation8 + $0x4]]
    %v252 = vstv %s251
    %v253 = vmul.f32 %v73, %v252
    %v256 = vunpack.c.l.s4 1983009808
    %v257 = vunpack.c.0.s8 %v256
    %v258 = vlaneseq
    %v259 = vshrl.u32 %v258, 7
    %v260 = vsub.s32 %v257, %v259
    %v261 = vrot.slane %v253, %v260
    %v262 = vcombine.high %v261, %v261
    %v265 = vadd.f32 %v231, %v261
    %v266 = vadd.f32 %v232, %v262
    %s267 = sld [smem:[#allocation8 + $0x16]]
    %v268 = vstv %s267
    %v269 = vmul.f32 %v73, %v268
    %v272 = vunpack.c.l.s4 1983009808
    %v273 = vunpack.c.0.s8 %v272
    %v274 = vlaneseq
    %v275 = vshrl.u32 %v274, 7
    %v276 = vsub.s32 %v273, %v275
    %v277 = vrot.slane %v269, %v276
    %v278 = vcombine.high %v277, %v277
    %v281 = vadd.f32 %v237, %v277
    %v282 = vadd.f32 %v238, %v278
    %s283 = sld [smem:[#allocation8 + $0x28]]
    %v284 = vstv %s283
    %v285 = vmul.f32 %v73, %v284
    %v288 = vunpack.c.l.s4 1983009808
    %v289 = vunpack.c.0.s8 %v288
    %v290 = vlaneseq
    %v291 = vshrl.u32 %v290, 7
    %v292 = vsub.s32 %v289, %v291
    %v293 = vrot.slane %v285, %v292
    %v294 = vcombine.high %v293, %v293
    %v297 = vadd.f32 %v243, %v293
    %v298 = vadd.f32 %v244, %v294
    %s299 = sld [smem:[#allocation8 + $0x3a]]
    %v300 = vstv %s299
    %v301 = vmul.f32 %v73, %v300
    %v304 = vunpack.c.l.s4 1983009808
    %v305 = vunpack.c.0.s8 %v304
    %v306 = vlaneseq
    %v307 = vshrl.u32 %v306, 7
    %v308 = vsub.s32 %v305, %v307
    %v309 = vrot.slane %v301, %v308
    %v310 = vcombine.high %v309, %v309
    %v313 = vadd.f32 %v249, %v309
    %v314 = vadd.f32 %v250, %v310
    %315 = vrot.lane.b32.xlu0 %v81, 127
    %v316 = vpop.permute.xlu0 %315
    %317 = vrot.lane.b32.xlu0 %v82, 127
    %v318 = vpop.permute.xlu0 %317
    %vm319 = vcmp.lt.s32.totalorder %v90, 127
    %v320 = vsel %vm319, %v316, %v318
    %v321 = vsel %vm319, %v318, %v316
    %v322 = vlaneseq
    %v323 = vshrl.u32 %v322, 7
    %v324 = vsub.s32 5, %v323
    %v325 = vrot.slane %v69, %v324
    %v326 = vlaneseq
    %v327 = vshrl.u32 %v326, 7
    %v328 = vsub.s32 5, %v327
    %v329 = vrot.slane %v70, %v328
    %v330 = vmul.f32 %v320, %v325
    %v331 = vmul.f32 %v321, %v329
    %s332 = sld [smem:[#allocation8 + $0x5]]
    %v333 = vstv %s332
    %v334 = vmul.f32 %v330, %v333
    %v335 = vmul.f32 %v331, %v333
    %v336 = vadd.f32 %v265, %v334
    %v337 = vadd.f32 %v266, %v335
    %s338 = sld [smem:[#allocation8 + $0x17]]
    %v339 = vstv %s338
    %v340 = vmul.f32 %v330, %v339
    %v341 = vmul.f32 %v331, %v339
    %v342 = vadd.f32 %v281, %v340
    %v343 = vadd.f32 %v282, %v341
    %s344 = sld [smem:[#allocation8 + $0x29]]
    %v345 = vstv %s344
    %v346 = vmul.f32 %v330, %v345
    %v347 = vmul.f32 %v331, %v345
    %v348 = vadd.f32 %v297, %v346
    %v349 = vadd.f32 %v298, %v347
    %s350 = sld [smem:[#allocation8 + $0x3b]]
    %v351 = vstv %s350
    %v352 = vmul.f32 %v330, %v351
    %v353 = vmul.f32 %v331, %v351
    %v354 = vadd.f32 %v313, %v352
    %v355 = vadd.f32 %v314, %v353
    %356 = vrot.lane.b32.xlu0 %v81, 113
    %v357 = vpop.permute.xlu0 %356
    %358 = vrot.lane.b32.xlu0 %v82, 113
    %v359 = vpop.permute.xlu0 %358
    %vm360 = vcmp.lt.s32.totalorder %v90, 113
    %v361 = vsel %vm360, %v357, %v359
    %v362 = vsel %vm360, %v359, %v357
    %v363 = vlaneseq
    %v364 = vshrl.u32 %v363, 7
    %v365 = vsub.s32 6, %v364
    %v366 = vrot.slane %v69, %v365
    %v367 = vlaneseq
    %v368 = vshrl.u32 %v367, 7
    %v369 = vsub.s32 6, %v368
    %v370 = vrot.slane %v70, %v369
    %v371 = vmul.f32 %v361, %v366
    %v372 = vmul.f32 %v362, %v370
    %s373 = sld [smem:[#allocation8 + $0x6]]
    %v374 = vstv %s373
    %v375 = vmul.f32 %v371, %v374
    %v376 = vmul.f32 %v372, %v374
    %v377 = vadd.f32 %v336, %v375
    %v378 = vadd.f32 %v337, %v376
    %s379 = sld [smem:[#allocation8 + $0x18]]
    %v380 = vstv %s379
    %v381 = vmul.f32 %v371, %v380
    %v382 = vmul.f32 %v372, %v380
    %v383 = vadd.f32 %v342, %v381
    %v384 = vadd.f32 %v343, %v382
    %s385 = sld [smem:[#allocation8 + $0x2a]]
    %v386 = vstv %s385
    %v387 = vmul.f32 %v371, %v386
    %v388 = vmul.f32 %v372, %v386
    %v389 = vadd.f32 %v348, %v387
    %v390 = vadd.f32 %v349, %v388
    %s391 = sld [smem:[#allocation8 + $0x3c]]
    %v392 = vstv %s391
    %v393 = vmul.f32 %v371, %v392
    %v394 = vmul.f32 %v372, %v392
    %v395 = vadd.f32 %v354, %v393
    %v396 = vadd.f32 %v355, %v394
    %397 = vrot.lane.b32.xlu0 %v81, 112
    %v398 = vpop.permute.xlu0 %397
    %399 = vrot.lane.b32.xlu0 %v82, 112
    %v400 = vpop.permute.xlu0 %399
    %vm401 = vcmp.lt.s32.totalorder %v90, 112
    %v402 = vsel %vm401, %v398, %v400
    %v403 = vsel %vm401, %v400, %v398
    %v404 = vlaneseq
    %v405 = vshrl.u32 %v404, 7
    %v406 = vsub.s32 7, %v405
    %v407 = vrot.slane %v69, %v406
    %v408 = vlaneseq
    %v409 = vshrl.u32 %v408, 7
    %v410 = vsub.s32 7, %v409
    %v411 = vrot.slane %v70, %v410
    %v412 = vmul.f32 %v402, %v407
    %v413 = vmul.f32 %v403, %v411
    %s414 = sld [smem:[#allocation8 + $0x7]]
    %v415 = vstv %s414
    %v416 = vmul.f32 %v412, %v415
    %v417 = vmul.f32 %v413, %v415
    %v418 = vadd.f32 %v377, %v416
    %v419 = vadd.f32 %v378, %v417
    %s420 = sld [smem:[#allocation8 + $0x19]]
    %v421 = vstv %s420
    %v422 = vmul.f32 %v412, %v421
    %v423 = vmul.f32 %v413, %v421
    %v424 = vadd.f32 %v383, %v422
    %v425 = vadd.f32 %v384, %v423
    %s426 = sld [smem:[#allocation8 + $0x2b]]
    %v427 = vstv %s426
    %v428 = vmul.f32 %v412, %v427
    %v429 = vmul.f32 %v413, %v427
    %v430 = vadd.f32 %v389, %v428
    %v431 = vadd.f32 %v390, %v429
    %s432 = sld [smem:[#allocation8 + $0x3d]]
    %v433 = vstv %s432
    %v434 = vmul.f32 %v412, %v433
    %v435 = vmul.f32 %v413, %v433
    %v436 = vadd.f32 %v395, %v434
    %v437 = vadd.f32 %v396, %v435
    %438 = vrot.lane.b32.xlu0 %v81, 111
    %v439 = vpop.permute.xlu0 %438
    %440 = vrot.lane.b32.xlu0 %v82, 111
    %v441 = vpop.permute.xlu0 %440
    %vm442 = vcmp.lt.s32.totalorder %v90, 111
    %v443 = vsel %vm442, %v439, %v441
    %v444 = vsel %vm442, %v441, %v439
    %v445 = vlaneseq
    %v446 = vshrl.u32 %v445, 7
    %v447 = vsub.s32 0, %v446
    %v448 = vrot.slane %v71, %v447
    %v449 = vlaneseq
    %v450 = vshrl.u32 %v449, 7
    %v451 = vsub.s32 0, %v450
    %v452 = vrot.slane %v72, %v451
    %v453 = vmul.f32 %v443, %v448
    %v454 = vmul.f32 %v444, %v452
    %s455 = sld [smem:[#allocation8 + $0x8]]
    %v456 = vstv %s455
    %v457 = vmul.f32 %v453, %v456
    %v458 = vmul.f32 %v454, %v456
    %v459 = vadd.f32 %v418, %v457
    %v460 = vadd.f32 %v419, %v458
    %s461 = sld [smem:[#allocation8 + $0x1a]]
    %v462 = vstv %s461
    %v463 = vmul.f32 %v453, %v462
    %v464 = vmul.f32 %v454, %v462
    %v465 = vadd.f32 %v424, %v463
    %v466 = vadd.f32 %v425, %v464
    %s467 = sld [smem:[#allocation8 + $0x2c]]
    %v468 = vstv %s467
    %v469 = vmul.f32 %v453, %v468
    %v470 = vmul.f32 %v454, %v468
    %v471 = vadd.f32 %v430, %v469
    %v472 = vadd.f32 %v431, %v470
    %s473 = sld [smem:[#allocation8 + $0x3e]]
    %v474 = vstv %s473
    %v475 = vmul.f32 %v453, %v474
    %v476 = vmul.f32 %v454, %v474
    %v477 = vadd.f32 %v436, %v475
    %v478 = vadd.f32 %v437, %v476
    %v479 = vld [vmem:[#allocation2 + $0x4] sm:$0xf]
    %v482 = vunpack.c.l.s4 1983009808
    %v483 = vunpack.c.0.s8 %v482
    %v484 = vlaneseq
    %v485 = vshrl.u32 %v484, 7
    %v486 = vsub.s32 %v483, %v485
    %v487 = vrot.slane %v479, %v486
    %v488 = vcombine.high %v487, %v487
    %491 = vrot.lane.b32.xlu0 %v487, 17
    %v492 = vpop.permute.xlu0 %491
    %493 = vrot.lane.b32.xlu0 %v488, 17
    %v494 = vpop.permute.xlu0 %493
    %v495 = vsel %vm91, %v492, %v494
    %v496 = vsel %vm91, %v494, %v492
    %v497 = vmul.f32 %v496, %v97
    %v498 = vmul.f32 %v495, %v101
    %s499 = sld [smem:[#allocation8 + $0x9]]
    %v500 = vstv %s499
    %v501 = vmul.f32 %v497, %v500
    %v502 = vmul.f32 %v498, %v500
    %v503 = vadd.f32 %v459, %v501
    %v504 = vadd.f32 %v460, %v502
    %s505 = sld [smem:[#allocation8 + $0x1b]]
    %v506 = vstv %s505
    %v507 = vmul.f32 %v497, %v506
    %v508 = vmul.f32 %v498, %v506
    %v509 = vadd.f32 %v465, %v507
    %v510 = vadd.f32 %v466, %v508
    %s511 = sld [smem:[#allocation8 + $0x2d]]
    %v512 = vstv %s511
    %v513 = vmul.f32 %v497, %v512
    %v514 = vmul.f32 %v498, %v512
    %v515 = vadd.f32 %v471, %v513
    %v516 = vadd.f32 %v472, %v514
    %s517 = sld [smem:[#allocation8 + $0x3f]]
    %v518 = vstv %s517
    %v519 = vmul.f32 %v497, %v518
    %v520 = vmul.f32 %v498, %v518
    %v521 = vadd.f32 %v477, %v519
    %v522 = vadd.f32 %v478, %v520
    %523 = vrot.lane.b32.xlu0 %v487, 16
    %v524 = vpop.permute.xlu0 %523
    %525 = vrot.lane.b32.xlu0 %v488, 16
    %v526 = vpop.permute.xlu0 %525
    %v527 = vsel %vm132, %v524, %v526
    %v528 = vsel %vm132, %v526, %v524
    %v529 = vmul.f32 %v528, %v138
    %v530 = vmul.f32 %v527, %v142
    %s531 = sld [smem:[#allocation8 + $0xa]]
    %v532 = vstv %s531
    %v533 = vmul.f32 %v529, %v532
    %v534 = vmul.f32 %v530, %v532
    %v535 = vadd.f32 %v503, %v533
    %v536 = vadd.f32 %v504, %v534
    %s537 = sld [smem:[#allocation8 + $0x1c]]
    %v538 = vstv %s537
    %v539 = vmul.f32 %v529, %v538
    %v540 = vmul.f32 %v530, %v538
    %v541 = vadd.f32 %v509, %v539
    %v542 = vadd.f32 %v510, %v540
    %s543 = sld [smem:[#allocation8 + $0x2e]]
    %v544 = vstv %s543
    %v545 = vmul.f32 %v529, %v544
    %v546 = vmul.f32 %v530, %v544
    %v547 = vadd.f32 %v515, %v545
    %v548 = vadd.f32 %v516, %v546
    %s549 = sld [smem:[#allocation8 + $0x40]]
    %v550 = vstv %s549
    %v551 = vmul.f32 %v529, %v550
    %v552 = vmul.f32 %v530, %v550
    %v553 = vadd.f32 %v521, %v551
    %v554 = vadd.f32 %v522, %v552
    %555 = vrot.lane.b32.xlu0 %v487, 15
    %v556 = vpop.permute.xlu0 %555
    %557 = vrot.lane.b32.xlu0 %v488, 15
    %v558 = vpop.permute.xlu0 %557
    %v559 = vsel %vm173, %v556, %v558
    %v560 = vsel %vm173, %v558, %v556
    %v561 = vmul.f32 %v560, %v179
    %v562 = vmul.f32 %v559, %v183
    %s563 = sld [smem:[#allocation8 + $0xb]]
    %v564 = vstv %s563
    %v565 = vmul.f32 %v561, %v564
    %v566 = vmul.f32 %v562, %v564
    %v567 = vadd.f32 %v535, %v565
    %v568 = vadd.f32 %v536, %v566
    %s569 = sld [smem:[#allocation8 + $0x1d]]
    %v570 = vstv %s569
    %v571 = vmul.f32 %v561, %v570
    %v572 = vmul.f32 %v562, %v570
    %v573 = vadd.f32 %v541, %v571
    %v574 = vadd.f32 %v542, %v572
    %s575 = sld [smem:[#allocation8 + $0x2f]]
    %v576 = vstv %s575
    %v577 = vmul.f32 %v561, %v576
    %v578 = vmul.f32 %v562, %v576
    %v579 = vadd.f32 %v547, %v577
    %v580 = vadd.f32 %v548, %v578
    %s581 = sld [smem:[#allocation8 + $0x41]]
    %v582 = vstv %s581
    %v583 = vmul.f32 %v561, %v582
    %v584 = vmul.f32 %v562, %v582
    %v585 = vadd.f32 %v553, %v583
    %v586 = vadd.f32 %v554, %v584
    %587 = vrot.lane.b32.xlu0 %v487, 1
    %v588 = vpop.permute.xlu0 %587
    %589 = vrot.lane.b32.xlu0 %v488, 1
    %v590 = vpop.permute.xlu0 %589
    %v591 = vsel %vm214, %v588, %v590
    %v592 = vsel %vm214, %v590, %v588
    %v593 = vmul.f32 %v592, %v220
    %v594 = vmul.f32 %v591, %v224
    %s595 = sld [smem:[#allocation8 + $0xc]]
    %v596 = vstv %s595
    %v597 = vmul.f32 %v593, %v596
    %v598 = vmul.f32 %v594, %v596
    %v599 = vadd.f32 %v567, %v597
    %v600 = vadd.f32 %v568, %v598
    %s601 = sld [smem:[#allocation8 + $0x1e]]
    %v602 = vstv %s601
    %v603 = vmul.f32 %v593, %v602
    %v604 = vmul.f32 %v594, %v602
    %v605 = vadd.f32 %v573, %v603
    %v606 = vadd.f32 %v574, %v604
    %s607 = sld [smem:[#allocation8 + $0x30]]
    %v608 = vstv %s607
    %v609 = vmul.f32 %v593, %v608
    %v610 = vmul.f32 %v594, %v608
    %v611 = vadd.f32 %v579, %v609
    %v612 = vadd.f32 %v580, %v610
    %s613 = sld [smem:[#allocation8 + $0x42]]
    %v614 = vstv %s613
    %v615 = vmul.f32 %v593, %v614
    %v616 = vmul.f32 %v594, %v614
    %v617 = vadd.f32 %v585, %v615
    %v618 = vadd.f32 %v586, %v616
    %s619 = sld [smem:[#allocation8 + $0xd]]
    %v620 = vstv %s619
    %v621 = vmul.f32 %v479, %v620
    %v624 = vunpack.c.l.s4 1983009808
    %v625 = vunpack.c.0.s8 %v624
    %v626 = vlaneseq
    %v627 = vshrl.u32 %v626, 7
    %v628 = vsub.s32 %v625, %v627
    %v629 = vrot.slane %v621, %v628
    %v630 = vcombine.high %v629, %v629
    %v633 = vadd.f32 %v599, %v629
    %v634 = vadd.f32 %v600, %v630
    %s635 = sld [smem:[#allocation8 + $0x1f]]
    %v636 = vstv %s635
    %v637 = vmul.f32 %v479, %v636
    %v640 = vunpack.c.l.s4 1983009808
    %v641 = vunpack.c.0.s8 %v640
    %v642 = vlaneseq
    %v643 = vshrl.u32 %v642, 7
    %v644 = vsub.s32 %v641, %v643
    %v645 = vrot.slane %v637, %v644
    %v646 = vcombine.high %v645, %v645
    %v649 = vadd.f32 %v605, %v645
    %v650 = vadd.f32 %v606, %v646
    %s651 = sld [smem:[#allocation8 + $0x31]]
    %v652 = vstv %s651
    %v653 = vmul.f32 %v479, %v652
    %v656 = vunpack.c.l.s4 1983009808
    %v657 = vunpack.c.0.s8 %v656
    %v658 = vlaneseq
    %v659 = vshrl.u32 %v658, 7
    %v660 = vsub.s32 %v657, %v659
    %v661 = vrot.slane %v653, %v660
    %v662 = vcombine.high %v661, %v661
    %v665 = vadd.f32 %v611, %v661
    %v666 = vadd.f32 %v612, %v662
    %s667 = sld [smem:[#allocation8 + $0x43]]
    %v668 = vstv %s667
    %v669 = vmul.f32 %v479, %v668
    %v672 = vunpack.c.l.s4 1983009808
    %v673 = vunpack.c.0.s8 %v672
    %v674 = vlaneseq
    %v675 = vshrl.u32 %v674, 7
    %v676 = vsub.s32 %v673, %v675
    %v677 = vrot.slane %v669, %v676
    %v678 = vcombine.high %v677, %v677
    %v681 = vadd.f32 %v617, %v677
    %v682 = vadd.f32 %v618, %v678
    %683 = vrot.lane.b32.xlu0 %v487, 127
    %v684 = vpop.permute.xlu0 %683
    %685 = vrot.lane.b32.xlu0 %v488, 127
    %v686 = vpop.permute.xlu0 %685
    %v687 = vsel %vm319, %v684, %v686
    %v688 = vsel %vm319, %v686, %v684
    %v689 = vmul.f32 %v687, %v325
    %v690 = vmul.f32 %v688, %v329
    %s691 = sld [smem:[#allocation8 + $0xe]]
    %v692 = vstv %s691
    %v693 = vmul.f32 %v689, %v692
    %v694 = vmul.f32 %v690, %v692
    %v695 = vadd.f32 %v633, %v693
    %v696 = vadd.f32 %v634, %v694
    %s697 = sld [smem:[#allocation8 + $0x20]]
    %v698 = vstv %s697
    %v699 = vmul.f32 %v689, %v698
    %v700 = vmul.f32 %v690, %v698
    %v701 = vadd.f32 %v649, %v699
    %v702 = vadd.f32 %v650, %v700
    %s703 = sld [smem:[#allocation8 + $0x32]]
    %v704 = vstv %s703
    %v705 = vmul.f32 %v689, %v704
    %v706 = vmul.f32 %v690, %v704
    %v707 = vadd.f32 %v665, %v705
    %v708 = vadd.f32 %v666, %v706
    %s709 = sld [smem:[#allocation8 + $0x44]]
    %v710 = vstv %s709
    %v711 = vmul.f32 %v689, %v710
    %v712 = vmul.f32 %v690, %v710
    %v713 = vadd.f32 %v681, %v711
    %v714 = vadd.f32 %v682, %v712
    %715 = vrot.lane.b32.xlu0 %v487, 113
    %v716 = vpop.permute.xlu0 %715
    %717 = vrot.lane.b32.xlu0 %v488, 113
    %v718 = vpop.permute.xlu0 %717
    %v719 = vsel %vm360, %v716, %v718
    %v720 = vsel %vm360, %v718, %v716
    %v721 = vmul.f32 %v719, %v366
    %v722 = vmul.f32 %v720, %v370
    %s723 = sld [smem:[#allocation8 + $0xf]]
    %v724 = vstv %s723
    %v725 = vmul.f32 %v721, %v724
    %v726 = vmul.f32 %v722, %v724
    %v727 = vadd.f32 %v695, %v725
    %v728 = vadd.f32 %v696, %v726
    %s729 = sld [smem:[#allocation8 + $0x21]]
    %v730 = vstv %s729
    %v731 = vmul.f32 %v721, %v730
    %v732 = vmul.f32 %v722, %v730
    %v733 = vadd.f32 %v701, %v731
    %v734 = vadd.f32 %v702, %v732
    %s735 = sld [smem:[#allocation8 + $0x33]]
    %v736 = vstv %s735
    %v737 = vmul.f32 %v721, %v736
    %v738 = vmul.f32 %v722, %v736
    %v739 = vadd.f32 %v707, %v737
    %v740 = vadd.f32 %v708, %v738
    %s741 = sld [smem:[#allocation8 + $0x45]]
    %v742 = vstv %s741
    %v743 = vmul.f32 %v721, %v742
    %v744 = vmul.f32 %v722, %v742
    %v745 = vadd.f32 %v713, %v743
    %v746 = vadd.f32 %v714, %v744
    %747 = vrot.lane.b32.xlu0 %v487, 112
    %v748 = vpop.permute.xlu0 %747
    %749 = vrot.lane.b32.xlu0 %v488, 112
    %v750 = vpop.permute.xlu0 %749
    %v751 = vsel %vm401, %v748, %v750
    %v752 = vsel %vm401, %v750, %v748
    %v753 = vmul.f32 %v751, %v407
    %v754 = vmul.f32 %v752, %v411
    %s755 = sld [smem:[#allocation8 + $0x10]]
    %v756 = vstv %s755
    %v757 = vmul.f32 %v753, %v756
    %v758 = vmul.f32 %v754, %v756
    %v759 = vadd.f32 %v727, %v757
    %v760 = vadd.f32 %v728, %v758
    %s761 = sld [smem:[#allocation8 + $0x22]]
    %v762 = vstv %s761
    %v763 = vmul.f32 %v753, %v762
    %v764 = vmul.f32 %v754, %v762
    %v765 = vadd.f32 %v733, %v763
    %v766 = vadd.f32 %v734, %v764
    %s767 = sld [smem:[#allocation8 + $0x34]]
    %v768 = vstv %s767
    %v769 = vmul.f32 %v753, %v768
    %v770 = vmul.f32 %v754, %v768
    %v771 = vadd.f32 %v739, %v769
    %v772 = vadd.f32 %v740, %v770
    %s773 = sld [smem:[#allocation8 + $0x46]]
    %v774 = vstv %s773
    %v775 = vmul.f32 %v753, %v774
    %v776 = vmul.f32 %v754, %v774
    %v777 = vadd.f32 %v745, %v775
    %v778 = vadd.f32 %v746, %v776
    %779 = vrot.lane.b32.xlu0 %v487, 111
    %v780 = vpop.permute.xlu0 %779
    %781 = vrot.lane.b32.xlu0 %v488, 111
    %v782 = vpop.permute.xlu0 %781
    %v783 = vsel %vm442, %v780, %v782
    %v784 = vsel %vm442, %v782, %v780
    %v785 = vmul.f32 %v783, %v448
    %v786 = vmul.f32 %v784, %v452
    %s787 = sld [smem:[#allocation8 + $0x11]]
    %v788 = vstv %s787
    %v789 = vmul.f32 %v785, %v788
    %v790 = vmul.f32 %v786, %v788
    %v791 = vadd.f32 %v759, %v789
    %v792 = vadd.f32 %v760, %v790
    %s793 = sld [smem:[#allocation8 + $0x23]]
    %v794 = vstv %s793
    %v795 = vmul.f32 %v785, %v794
    %v796 = vmul.f32 %v786, %v794
    %v797 = vadd.f32 %v765, %v795
    %v798 = vadd.f32 %v766, %v796
    %s799 = sld [smem:[#allocation8 + $0x35]]
    %v800 = vstv %s799
    %v801 = vmul.f32 %v785, %v800
    %v802 = vmul.f32 %v786, %v800
    %v803 = vadd.f32 %v771, %v801
    %v804 = vadd.f32 %v772, %v802
    %s805 = sld [smem:[#allocation8 + $0x47]]
    %v806 = vstv %s805
    %v807 = vmul.f32 %v785, %v806
    %v808 = vmul.f32 %v786, %v806
    %v809 = vadd.f32 %v777, %v807
    %v810 = vadd.f32 %v778, %v808
    %s811 = sld [smem:[#allocation9]]
    %v812 = vstv %s811
    %v813 = vadd.f32 %v791, %v812
    %v814 = vadd.f32 %v792, %v812
    %s815 = sld [smem:[#allocation9 + $0x1]]
    %v816 = vstv %s815
    %v817 = vadd.f32 %v797, %v816
    %v818 = vadd.f32 %v798, %v816
    %v819 = vld [vmem:[#allocation2 + $0x8] sm:$0xf]
    %v822 = vcombine.low %v813, %v814
    %v824 = vunpack.c.l.s4 1983009808
    %v825 = vunpack.c.0.s8 %v824
    %v826 = vlaneseq
    %v827 = vshrl.u32 %v826, 7
    %v828 = vsub.s32 %v825, %v827
    %v829 = vrot.slane %v822, %v828
    %v831 = vsub.f32 %v819, %v829
    %v832 = vsub.f32 0.0, %v817
    %v833 = vsub.f32 0.0, %v818
    %v834 = vmul.f32 %v831, %v831
    %v835 = vmul.f32 %v834, 0.5
    %v836 = vmul.f32 %v817, -2.0
    %v837 = vmul.f32 %v818, -2.0
    %v838 = vmul.f32 %v836, 1.442695
    %v839 = vpow.pop %v838
    %v840 = vmul.f32 %v837, 1.442695
    %v841 = vpow.pop %v840
    %v844 = vcombine.low %v839, %v841
    %v846 = vunpack.c.l.s4 1983009808
    %v847 = vunpack.c.0.s8 %v846
    %v848 = vlaneseq
    %v849 = vshrl.u32 %v848, 7
    %v850 = vsub.s32 %v847, %v849
    %v851 = vrot.slane %v844, %v850
    %v853 = vmul.f32 %v835, %v851
    %v856 = vunpack.c.l.s4 1983009808
    %v857 = vunpack.c.0.s8 %v856
    %v858 = vlaneseq
    %v859 = vshrl.u32 %v858, 7
    %v860 = vsub.s32 %v857, %v859
    %v861 = vrot.slane %v853, %v860
    %v862 = vcombine.high %v861, %v861
    %v865 = vsub.f32 %v832, %v861
    %v866 = vsub.f32 %v833, %v862
    %s867 = sld [smem:[#allocation9 + $0x2]]
    %v868 = vstv %s867
    %v869 = vadd.f32 %v803, %v868
    %v870 = vadd.f32 %v804, %v868
    %s871 = sld [smem:[#allocation9 + $0x3]]
    %v872 = vstv %s871
    %v873 = vadd.f32 %v809, %v872
    %v874 = vadd.f32 %v810, %v872
    %v875 = vld [vmem:[#allocation2 + $0xc] sm:$0xf]
    %v878 = vcombine.low %v869, %v870
    %v880 = vunpack.c.l.s4 1983009808
    %v881 = vunpack.c.0.s8 %v880
    %v882 = vlaneseq
    %v883 = vshrl.u32 %v882, 7
    %v884 = vsub.s32 %v881, %v883
    %v885 = vrot.slane %v878, %v884
    %v887 = vsub.f32 %v875, %v885
    %v888 = vsub.f32 %v865, %v873
    %v889 = vsub.f32 %v866, %v874
    %v890 = vmul.f32 %v887, %v887
    %v891 = vmul.f32 %v890, 0.5
    %v892 = vmul.f32 %v873, -2.0
    %v893 = vmul.f32 %v874, -2.0
    %v894 = vmul.f32 %v892, 1.442695
    %v895 = vpow.pop %v894
    %v896 = vmul.f32 %v893, 1.442695
    %v897 = vpow.pop %v896
    %v900 = vcombine.low %v895, %v897
    %v902 = vunpack.c.l.s4 1983009808
    %v903 = vunpack.c.0.s8 %v902
    %v904 = vlaneseq
    %v905 = vshrl.u32 %v904, 7
    %v906 = vsub.s32 %v903, %v905
    %v907 = vrot.slane %v900, %v906
    %v909 = vmul.f32 %v891, %v907
    %v912 = vunpack.c.l.s4 1983009808
    %v913 = vunpack.c.0.s8 %v912
    %v914 = vlaneseq
    %v915 = vshrl.u32 %v914, 7
    %v916 = vsub.s32 %v913, %v915
    %v917 = vrot.slane %v909, %v916
    %v918 = vcombine.high %v917, %v917
    %v921 = vsub.f32 %v888, %v917
    %v922 = vsub.f32 %v889, %v918
    %vm923 = vcmask 1041408
    %v924 = vsel %vm923, %v921, 0.0
    %v925 = vsel %vm923, %v922, 0.0
    %v926 = vadd.f32 %v924, %v925
    %927 = vadd.xlane.f32.xlu0 %v926
    %v928 = vpop.xlane.xlu0 %927
    %v929 = vsub.f32 %v928, 470.49652
    %930 = vst [vmem:[#allocation11] sm:$0x3] %v929
    // Predicated region
    $region34: #{tpu_custom_call.1} parent=1 // pred_check
      _
    $region35: #{tpu_custom_call.1} parent=1 // pred_check_branch
      %932 = sbr.rel (0) target = $region37
    $region36: #{tpu_custom_call.1} parent=1 // pred_region
      %s934 = ssub.s32 32, 32
      %935 = vsyncadd [#allocation4], %s934
      %s937 = sshll.u32 [#allocation11], 4
      %s938 = int_to_ptr.vmem [resolvable:$true] %s937
      %940 = dma.vmem_to_hbm [thread:$0]  %s938, 32, %s4, [#allocation4]
    $region37: #{tpu_custom_call.1} parent=1 // pred_fallthru
      _
    // Predicated region
    $region38: #{tpu_custom_call.1} parent=1 // pred_check
      _
    $region39: #{tpu_custom_call.1} parent=1 // pred_check_branch
      %942 = sbr.rel (0) target = $region41
    $region40: #{tpu_custom_call.1} parent=1 // pred_region
      %943 = dma.done [#allocation4], 32
    $region41: #{tpu_custom_call.1} parent=1 // pred_fallthru
      _
    %944 = vsyncpa [#allocation3], 1
    %945 = vsyncpa [#allocation7], 1
    %946 = vsyncpa [#allocation4], 1
    %947 = vsyncpa [#allocation5], 1
    %948 = vsyncpa [#allocation10], 1

</llo_original>
